<compile_context>
chip_gen: v5e
topology: v5e:2x2
jax: 0.10.0
libtpu: 0.0.40
codegen_flags: <defaults>
</compile_context>

<pallas_src>
import jax
import jax.numpy as jnp
from jax.experimental import pallas as pl
from jax.experimental.pallas import tpu as pltpu


def _cmix_kernel(x_ref, xs_ref, maa_k_ref, maa_r_ref,
                 wk_ref, wv_ref, wr_ref, o_ref, kv_acc):
    f = pl.program_id(1)
    nf = pl.num_programs(1)

    # Token mixing in f32 (tiny VALU work), then cast to the weight dtype so
    # the MXU runs at native (e.g. bf16) throughput with f32 accumulation.
    x = x_ref[...].astype(jnp.float32)                      # (tile_m, C)
    xx = xs_ref[...].astype(jnp.float32) - x                # time-shifted delta
    xk = (x + xx * maa_k_ref[...].astype(jnp.float32)).astype(wk_ref.dtype)

    @pl.when(f == 0)
    def _():
        kv_acc[...] = jnp.zeros_like(kv_acc)

    # key -> relu^2 -> value, accumulated over the FFN (F) tiles.
    k = jnp.dot(xk, wk_ref[...], preferred_element_type=jnp.float32)  # (tile_m, tile_f)
    k = jnp.maximum(k, 0.0)
    k = k * k
    kv_acc[...] += jnp.dot(k.astype(wv_ref.dtype), wv_ref[...],
                           preferred_element_type=jnp.float32)        # (tile_m, C)

    @pl.when(f == nf - 1)
    def _():
        xr = (x + xx * maa_r_ref[...].astype(jnp.float32)).astype(wr_ref.dtype)
        r = jnp.dot(xr, wr_ref[...], preferred_element_type=jnp.float32)
        o_ref[...] = (jax.nn.sigmoid(r) * kv_acc[...]).astype(o_ref.dtype)


def birwkv_cmix_x060(x, time_maa_k, time_maa_r, wk_t, wv_t, wr_t,
                     *, tile_m=256, tile_f=512):
    """x: (B, T, C).  wk_t: (C, F), wv_t: (F, C), wr_t: (C, C) (pre-transposed)."""
    B, T, C = x.shape
    F = wk_t.shape[1]
    assert wk_t.shape == (C, F) and wv_t.shape == (F, C) and wr_t.shape == (C, C)

    # time_shift: prepend a zero row along T, drop the last row.
    # TODO(synk): computing the shift in-kernel (per-sequence boundary rows)
    # would avoid writing + re-reading a second (B,T,C) activation copy in HBM.
    x_shift = jnp.pad(x, ((0, 0), (1, 0), (0, 0)))[:, :T, :]

    M = B * T
    xf = x.reshape(M, C)
    xsf = x_shift.reshape(M, C)

    # --- row tiling (pad M up to a multiple of tile_m; padded rows sliced off) ---
    tile_m = min(tile_m, M)
    if tile_m < M:                       # keep sublane alignment when actually tiling
        tile_m = max(8, (tile_m // 8) * 8)
    Mp = pl.cdiv(M, tile_m) * tile_m
    if Mp != M:
        xf = jnp.pad(xf, ((0, Mp - M), (0, 0)))
        xsf = jnp.pad(xsf, ((0, Mp - M), (0, 0)))

    # --- FFN tiling (zero-padded F columns contribute exactly 0 to the output) ---
    tile_f = min(tile_f, F)
    if tile_f < F:
        tile_f = max(128, (tile_f // 128) * 128)
    Fp = pl.cdiv(F, tile_f) * tile_f
    if Fp != F:
        wk_t = jnp.pad(wk_t, ((0, 0), (0, Fp - F)))
        wv_t = jnp.pad(wv_t, ((0, Fp - F), (0, 0)))

    maa_k = time_maa_k.reshape(1, C)
    maa_r = time_maa_r.reshape(1, C)

    n_row = Mp // tile_m
    n_f = Fp // tile_f

    row_spec = pl.BlockSpec((tile_m, C), lambda i, f: (i, 0))

    # VMEM budget: double-buffered activation tiles + weight tiles + f32 acc.
    in_sz = jnp.dtype(x.dtype).itemsize
    w_sz = jnp.dtype(wk_t.dtype).itemsize
    est_bytes = (3 * tile_m * C * in_sz * 2
                 + (2 * C * tile_f + C * C) * w_sz * 2
                 + 2 * C * 4 * 2
                 + tile_m * C * 4)
    vmem_limit = int(min(max(int(est_bytes * 1.5), 32 * 1024 * 1024),
                         56 * 1024 * 1024))

    cost = pl.CostEstimate(
        flops=int(2 * M * (2 * C * F + C * C)),
        transcendentals=int(M * C),
        bytes_accessed=int(3 * M * C * in_sz + (2 * C * F + C * C) * w_sz),
    )

    # TODO(synk): constant-index blocks (maa, wr) could be single-buffered via
    # pipeline_mode=pl.Buffered(1) to halve their resident VMEM.
    out = pl.pallas_call(
        _cmix_kernel,
        out_shape=jax.ShapeDtypeStruct((Mp, C), x.dtype),
        grid_spec=pltpu.PrefetchScalarGridSpec(
            num_scalar_prefetch=0,
            grid=(n_row, n_f),
            in_specs=[
                row_spec,                                          # x
                pl.BlockSpec((tile_m, C), lambda i, f: (i, 0)),    # shifted x
                pl.BlockSpec((1, C), lambda i, f: (0, 0)),         # time_maa_k
                pl.BlockSpec((1, C), lambda i, f: (0, 0)),         # time_maa_r
                pl.BlockSpec((C, tile_f), lambda i, f: (0, f)),    # key weight^T
                pl.BlockSpec((tile_f, C), lambda i, f: (f, 0)),    # value weight^T
                pl.BlockSpec((C, C), lambda i, f: (0, 0)),         # receptance weight^T
            ],
            out_specs=pl.BlockSpec((tile_m, C), lambda i, f: (i, 0)),
            scratch_shapes=[pltpu.VMEM((tile_m, C), jnp.float32)],
        ),
        compiler_params=pltpu.CompilerParams(
            dimension_semantics=("parallel", "arbitrary"),
            vmem_limit_bytes=vmem_limit),
        cost_estimate=cost,
    )(xf, xsf, maa_k, maa_r, wk_t, wv_t, wr_t)

    return out[:M].reshape(B, T, C)


def _reference(x, time_maa_k, time_maa_r, wk_t, wv_t, wr_t):
    B, T, C = x.shape
    x_shift = jnp.pad(x, ((0, 0), (1, 0), (0, 0)))[:, :T, :]
    xx = x_shift - x
    xk = x + xx * time_maa_k.reshape(1, 1, C)
    xr = x + xx * time_maa_r.reshape(1, 1, C)
    k = jnp.maximum(xk @ wk_t, 0.0) ** 2
    kv = k @ wv_t
    return jax.nn.sigmoid(xr @ wr_t) * kv


if __name__ == "__main__":
    # small, module-consistent shapes
    B, T, C, FFN = 2, 8, 32, 64           # n_embd=32, dim_ffn=64
    n_layer, layer_id = 2, 0

    key = jax.random.PRNGKey(0)
    k_x, k_wk, k_wv, k_wr = jax.random.split(key, 4)

    x = jax.random.normal(k_x, (B, T, C), dtype=jnp.float32)

    # deterministic parameter init, matching the module's __init__ math
    ratio_1_to_almost0 = 1.0 - layer_id / n_layer
    ddd = jnp.arange(C, dtype=jnp.float32) / C
    time_maa_k = 1.0 - jnp.power(ddd, ratio_1_to_almost0)
    time_maa_r = 1.0 - jnp.power(ddd, ratio_1_to_almost0)

    # nn.Linear(in, out, bias=False) weight is (out, in); store transposed (in, out)
    wk_t = jax.random.normal(k_wk, (C, FFN), dtype=jnp.float32) * 0.02
    wv_t = jax.random.normal(k_wv, (FFN, C), dtype=jnp.float32) * 0.02
    wr_t = jax.random.normal(k_wr, (C, C), dtype=jnp.float32) * 0.02

    out = birwkv_cmix_x060(x, time_maa_k, time_maa_r, wk_t, wv_t, wr_t)
    out = jax.block_until_ready(out)

    ref = _reference(x, time_maa_k, time_maa_r, wk_t, wv_t, wr_t)
    assert out.shape == (B, T, C)
    assert jnp.allclose(out, ref, atol=1e-5, rtol=1e-5)

    print("KERNEL_OK")
</pallas_src>

<mosaic_0001>
module attributes {stable_mosaic.version = 11 : i64} {
  func.func @_cmix_kernel(%arg0: i32, %arg1: i32, %arg2: memref<16x32xf32, #tpu.memory_space<vmem>>, %arg3: memref<16x32xf32, #tpu.memory_space<vmem>>, %arg4: memref<1x32xf32, #tpu.memory_space<vmem>>, %arg5: memref<1x32xf32, #tpu.memory_space<vmem>>, %arg6: memref<32x64xf32, #tpu.memory_space<vmem>>, %arg7: memref<64x32xf32, #tpu.memory_space<vmem>>, %arg8: memref<32x32xf32, #tpu.memory_space<vmem>>, %arg9: memref<16x32xf32, #tpu.memory_space<vmem>>, %arg10: memref<16x32xf32, #tpu.memory_space<vmem>>) attributes {dimension_semantics = [#tpu.dimension_semantics<parallel>, #tpu.dimension_semantics<arbitrary>], iteration_bounds = array<i64: 1, 1>, scalar_prefetch = 0 : i64, scratch_operands = 1 : i64, tpu.core_type = #tpu.core_type<tc>, window_params = [{transform_indices = @transform_0, window_bounds = array<i64: 16, 32>}, {transform_indices = @transform_1, window_bounds = array<i64: 16, 32>}, {pipeline_mode = #tpu.pipeline_mode<synchronous>, transform_indices = @transform_2, window_bounds = array<i64: 1, 32>}, {pipeline_mode = #tpu.pipeline_mode<synchronous>, transform_indices = @transform_3, window_bounds = array<i64: 1, 32>}, {transform_indices = @transform_4, window_bounds = array<i64: 32, 64>}, {transform_indices = @transform_5, window_bounds = array<i64: 64, 32>}, {pipeline_mode = #tpu.pipeline_mode<synchronous>, transform_indices = @transform_6, window_bounds = array<i64: 32, 32>}, {transform_indices = @transform_7, window_bounds = array<i64: 16, 32>}]} {
    %c0 = arith.constant 0 : index
    %c0_0 = arith.constant 0 : index
    %0 = vector.load %arg2[%c0, %c0_0] : memref<16x32xf32, #tpu.memory_space<vmem>>, vector<16x32xf32>
    %c0_1 = arith.constant 0 : index
    %c0_2 = arith.constant 0 : index
    %1 = vector.load %arg3[%c0_1, %c0_2] : memref<16x32xf32, #tpu.memory_space<vmem>>, vector<16x32xf32>
    %2 = arith.subf %1, %0 : vector<16x32xf32>
    %c0_3 = arith.constant 0 : index
    %c0_4 = arith.constant 0 : index
    %3 = vector.load %arg4[%c0_3, %c0_4] : memref<1x32xf32, #tpu.memory_space<vmem>>, vector<1x32xf32>
    %4 = vector.broadcast %3 : vector<1x32xf32> to vector<16x32xf32>
    %5 = arith.mulf %2, %4 : vector<16x32xf32>
    %6 = arith.addf %0, %5 : vector<16x32xf32>
    %c0_i32 = arith.constant 0 : i32
    %7 = arith.cmpi eq, %arg1, %c0_i32 : i32
    %8 = arith.extui %7 : i1 to i32
    %c0_i32_5 = arith.constant 0 : i32
    %9 = arith.cmpi ne, %8, %c0_i32_5 : i32
    scf.if %9 {
      %cst_18 = arith.constant 0.000000e+00 : f32
      %23 = vector.broadcast %cst_18 : f32 to vector<16x32xf32>
      %c0_19 = arith.constant 0 : index
      %c0_20 = arith.constant 0 : index
      %24 = vector.load %arg10[%c0_19, %c0_20] : memref<16x32xf32, #tpu.memory_space<vmem>>, vector<16x32xf32>
      tpu.vector_store %arg10[%c0_19, %c0_20], %23 {strides = array<i32>} : memref<16x32xf32, #tpu.memory_space<vmem>>, vector<16x32xf32>,
    } else {
    }
    %c0_6 = arith.constant 0 : index
    %c0_7 = arith.constant 0 : index
    %10 = vector.load %arg6[%c0_6, %c0_7] : memref<32x64xf32, #tpu.memory_space<vmem>>, vector<32x64xf32>
    %cst = arith.constant dense<0.000000e+00> : vector<16x64xf32>
    %11 = tpu.matmul %6, %10, %cst {dimension_numbers = #tpu.dot_dimension_numbers<[1], [0], [0], [1], [0, 0, 1, 1], [], []>} : vector<16x32xf32>, vector<32x64xf32>, vector<16x64xf32> -> vector<16x64xf32>
    %cst_8 = arith.constant 0.000000e+00 : f32
    %12 = vector.broadcast %cst_8 : f32 to vector<16x64xf32>
    %13 = arith.maximumf %11, %12 : vector<16x64xf32>
    %14 = arith.mulf %13, %13 : vector<16x64xf32>
    %c0_9 = arith.constant 0 : index
    %c0_10 = arith.constant 0 : index
    %15 = vector.load %arg10[%c0_9, %c0_10] : memref<16x32xf32, #tpu.memory_space<vmem>>, vector<16x32xf32>
    %c0_11 = arith.constant 0 : index
    %c0_12 = arith.constant 0 : index
    %16 = vector.load %arg7[%c0_11, %c0_12] : memref<64x32xf32, #tpu.memory_space<vmem>>, vector<64x32xf32>
    %cst_13 = arith.constant dense<0.000000e+00> : vector<16x32xf32>
    %17 = tpu.matmul %14, %16, %cst_13 {dimension_numbers = #tpu.dot_dimension_numbers<[1], [0], [0], [1], [0, 0, 1, 1], [], []>} : vector<16x64xf32>, vector<64x32xf32>, vector<16x32xf32> -> vector<16x32xf32>
    %18 = arith.addf %15, %17 : vector<16x32xf32>
    %c0_14 = arith.constant 0 : index
    %c0_15 = arith.constant 0 : index
    %19 = vector.load %arg10[%c0_14, %c0_15] : memref<16x32xf32, #tpu.memory_space<vmem>>, vector<16x32xf32>
    tpu.vector_store %arg10[%c0_14, %c0_15], %18 {strides = array<i32>} : memref<16x32xf32, #tpu.memory_space<vmem>>, vector<16x32xf32>,
    %c0_i32_16 = arith.constant 0 : i32
    %20 = arith.cmpi eq, %arg1, %c0_i32_16 : i32
    %21 = arith.extui %20 : i1 to i32
    %c0_i32_17 = arith.constant 0 : i32
    %22 = arith.cmpi ne, %21, %c0_i32_17 : i32
    scf.if %22 {
      %c0_18 = arith.constant 0 : index
      %c0_19 = arith.constant 0 : index
      %23 = vector.load %arg5[%c0_18, %c0_19] : memref<1x32xf32, #tpu.memory_space<vmem>>, vector<1x32xf32>
      %24 = vector.broadcast %23 : vector<1x32xf32> to vector<16x32xf32>
      %25 = arith.mulf %2, %24 : vector<16x32xf32>
      %26 = arith.addf %0, %25 : vector<16x32xf32>
      %c0_20 = arith.constant 0 : index
      %c0_21 = arith.constant 0 : index
      %27 = vector.load %arg8[%c0_20, %c0_21] : memref<32x32xf32, #tpu.memory_space<vmem>>, vector<32x32xf32>
      %cst_22 = arith.constant dense<0.000000e+00> : vector<16x32xf32>
      %28 = tpu.matmul %26, %27, %cst_22 {dimension_numbers = #tpu.dot_dimension_numbers<[1], [0], [0], [1], [0, 0, 1, 1], [], []>} : vector<16x32xf32>, vector<32x32xf32>, vector<16x32xf32> -> vector<16x32xf32>
      %29 = arith.negf %28 : vector<16x32xf32>
      %30 = math.exp %29 : vector<16x32xf32>
      %cst_23 = arith.constant 1.000000e+00 : f32
      %31 = vector.broadcast %cst_23 : f32 to vector<16x32xf32>
      %32 = arith.addf %31, %30 : vector<16x32xf32>
      %33 = arith.divf %31, %32 : vector<16x32xf32>
      %c0_24 = arith.constant 0 : index
      %c0_25 = arith.constant 0 : index
      %34 = vector.load %arg10[%c0_24, %c0_25] : memref<16x32xf32, #tpu.memory_space<vmem>>, vector<16x32xf32>
      %35 = arith.mulf %33, %34 : vector<16x32xf32>
      %c0_26 = arith.constant 0 : index
      %c0_27 = arith.constant 0 : index
      %36 = vector.load %arg9[%c0_26, %c0_27] : memref<16x32xf32, #tpu.memory_space<vmem>>, vector<16x32xf32>
      tpu.vector_store %arg9[%c0_26, %c0_27], %35 {strides = array<i32>} : memref<16x32xf32, #tpu.memory_space<vmem>>, vector<16x32xf32>,
    } else {
    }
    return
  }
  func.func @transform_0(%arg0: i32, %arg1: i32) -> (i32, i32) {
    %c0_i32 = arith.constant 0 : i32
    %c0_i32_0 = arith.constant 0 : i32
    return %arg0, %c0_i32 : i32, i32
  }
  func.func @transform_1(%arg0: i32, %arg1: i32) -> (i32, i32) {
    %c0_i32 = arith.constant 0 : i32
    %c0_i32_0 = arith.constant 0 : i32
    return %arg0, %c0_i32 : i32, i32
  }
  func.func @transform_2(%arg0: i32, %arg1: i32) -> (i32, i32) {
    %c0_i32 = arith.constant 0 : i32
    %c0_i32_0 = arith.constant 0 : i32
    %c0_i32_1 = arith.constant 0 : i32
    return %c0_i32, %c0_i32_0 : i32, i32
  }
  func.func @transform_3(%arg0: i32, %arg1: i32) -> (i32, i32) {
    %c0_i32 = arith.constant 0 : i32
    %c0_i32_0 = arith.constant 0 : i32
    %c0_i32_1 = arith.constant 0 : i32
    return %c0_i32, %c0_i32_0 : i32, i32
  }
  func.func @transform_4(%arg0: i32, %arg1: i32) -> (i32, i32) {
    %c0_i32 = arith.constant 0 : i32
    %c0_i32_0 = arith.constant 0 : i32
    return %c0_i32, %arg1 : i32, i32
  }
  func.func @transform_5(%arg0: i32, %arg1: i32) -> (i32, i32) {
    %c0_i32 = arith.constant 0 : i32
    %c0_i32_0 = arith.constant 0 : i32
    return %arg1, %c0_i32 : i32, i32
  }
  func.func @transform_6(%arg0: i32, %arg1: i32) -> (i32, i32) {
    %c0_i32 = arith.constant 0 : i32
    %c0_i32_0 = arith.constant 0 : i32
    %c0_i32_1 = arith.constant 0 : i32
    return %c0_i32, %c0_i32_0 : i32, i32
  }
  func.func @transform_7(%arg0: i32, %arg1: i32) -> (i32, i32) {
    %c0_i32 = arith.constant 0 : i32
    %c0_i32_0 = arith.constant 0 : i32
    return %arg0, %c0_i32 : i32, i32
  }
}

</mosaic_0001>

<llo_original>
// kernel: tpu_custom_call.1
$region0: #{tpu_custom_call.1}
  #allocation0 [shape = 'u32[]', space=smem, size = 0x4, offset = 0x4, fixed_abs, tag = 'smem constant byte address 0x4 - core index']
  #allocation1 [shape = 'u32[72,128]{1,0:T(1,128)}', space=vmem, size = 0x9000, scoped, tag = 'internal scratch']
  #allocation2 [shape = 'f32[16,32]{1,0:T(8,128)}', space=vmem, size = 0x2000, scoped, tag = 'scratch operand']
  %s0 = inlined_call_operand.vmem [shape: f32[16,32], index: 0, kind: input, shape index: {}]
  %s1 = inlined_call_operand.vmem [shape: f32[16,32], index: 1, kind: input, shape index: {}]
  %s2 = inlined_call_operand.vmem [shape: f32[1,32], index: 2, kind: input, shape index: {}]
  %s3 = inlined_call_operand.hbm [shape: f32[1,32], index: 3, kind: input, shape index: {}]
  %s4 = inlined_call_operand.vmem [shape: f32[32,64], index: 4, kind: input, shape index: {}]
  %s5 = inlined_call_operand.vmem [shape: f32[64,32], index: 5, kind: input, shape index: {}]
  %s6 = inlined_call_operand.vmem [shape: f32[32,32], index: 6, kind: input, shape index: {}]
  %s7 = inlined_call_operand.hbm [shape: f32[16,32], index: 7, kind: output, shape index: {}]
  %s8 = sld [smem:[#allocation0]]
  $region50: #{tpu_custom_call.1} parent=0
    _
  %s10 = ssub.s32 1, %s8
  %s11 = scalar_select 0, %s10, %s8
  $region1: #{tpu_custom_call.1} parent=0
    #allocation3 [shape = 'u8[512]{0}', space=vmem, size = 0x400, scoped, tag = 'input window, operand 3, single buffered']
    #allocation4 [shape = 's32[1]{0}', space=sflag, size = 0x4, scoped, tag = 'scoped memory for tpu_custom_call.1']
    #allocation5 [shape = 's32[1]{0}', space=sflag, size = 0x4, scoped, tag = 'scoped memory for tpu_custom_call.1']
    #allocation6 [shape = 'u8[8192]{0}', space=vmem, size = 0x2000, scoped, tag = 'output window, operand 0, single buffered']
    %12 = vsyncpa [#allocation4], 0
    %13 = vsyncpa [#allocation5], 0
    // Predicated region
    $region2: #{tpu_custom_call.1} parent=1 // pred_check
      _
    $region3: #{tpu_custom_call.1} parent=1 // pred_check_branch
      %15 = sbr.rel (0) target = $region5
    $region4: #{tpu_custom_call.1} parent=1 // pred_region
      _
    $region5: #{tpu_custom_call.1} parent=1 // pred_fallthru
      _
    // Predicated region
    $region6: #{tpu_custom_call.1} parent=1 // pred_check
      _
    $region7: #{tpu_custom_call.1} parent=1 // pred_check_branch
      %17 = sbr.rel (0) target = $region9
    $region8: #{tpu_custom_call.1} parent=1 // pred_region
      _
    $region9: #{tpu_custom_call.1} parent=1 // pred_fallthru
      _
    // Predicated region
    $region10: #{tpu_custom_call.1} parent=1 // pred_check
      _
    $region11: #{tpu_custom_call.1} parent=1 // pred_check_branch
      %19 = sbr.rel (0) target = $region13
    $region12: #{tpu_custom_call.1} parent=1 // pred_region
      _
    $region13: #{tpu_custom_call.1} parent=1 // pred_fallthru
      _
    // Predicated region
    $region14: #{tpu_custom_call.1} parent=1 // pred_check
      _
    $region15: #{tpu_custom_call.1} parent=1 // pred_check_branch
      %21 = sbr.rel (0) target = $region17
    $region16: #{tpu_custom_call.1} parent=1 // pred_region
      %23 = vsyncadd [#allocation4], 0
      %s25 = sshll.u32 %s3, 4
      %s26 = int_to_ptr.hbm [resolvable:$true] %s25
      %s27 = sshll.u32 [#allocation3], 4
      %s28 = int_to_ptr.vmem [resolvable:$true] %s27
      %30 = dma.hbm_to_vmem [thread:$0]  %s26, 16, %s28, [#allocation4]
    $region17: #{tpu_custom_call.1} parent=1 // pred_fallthru
      _
    // Predicated region
    $region18: #{tpu_custom_call.1} parent=1 // pred_check
      _
    $region19: #{tpu_custom_call.1} parent=1 // pred_check_branch
      %32 = sbr.rel (0) target = $region21
    $region20: #{tpu_custom_call.1} parent=1 // pred_region
      _
    $region21: #{tpu_custom_call.1} parent=1 // pred_fallthru
      _
    // Predicated region
    $region22: #{tpu_custom_call.1} parent=1 // pred_check
      _
    $region23: #{tpu_custom_call.1} parent=1 // pred_check_branch
      %34 = sbr.rel (0) target = $region25
    $region24: #{tpu_custom_call.1} parent=1 // pred_region
      _
    $region25: #{tpu_custom_call.1} parent=1 // pred_fallthru
      _
    // Predicated region
    $region26: #{tpu_custom_call.1} parent=1 // pred_check
      _
    $region27: #{tpu_custom_call.1} parent=1 // pred_check_branch
      %36 = sbr.rel (0) target = $region29
    $region28: #{tpu_custom_call.1} parent=1 // pred_region
      _
    $region29: #{tpu_custom_call.1} parent=1 // pred_fallthru
      _
    // Predicated region
    $region30: #{tpu_custom_call.1} parent=1 // pred_check
      _
    $region31: #{tpu_custom_call.1} parent=1 // pred_check_branch
      %38 = sbr.rel (0) target = $region33
    $region32: #{tpu_custom_call.1} parent=1 // pred_region
      %40 = dma.done [#allocation4], 16
    $region33: #{tpu_custom_call.1} parent=1 // pred_fallthru
      _
    %v41 = vld [vmem:[%s0] sm:$0xff]
    %v42 = vld [vmem:[%s0 + $0x8] sm:$0xff]
    %v43 = vld [vmem:[%s1] sm:$0xff]
    %v44 = vld [vmem:[%s1 + $0x8] sm:$0xff]
    %v45 = vsub.f32 %v43, %v41
    %v46 = vsub.f32 %v44, %v42
    %v47 = vld [vmem:[%s2] sm:$0x1]
    %v49 = vperm.slane %v47, 0
    %v51 = vmul.f32 %v45, %v49
    %v52 = vmul.f32 %v46, %v49
    %v53 = vadd.f32 %v41, %v51
    %v54 = vadd.f32 %v42, %v52
    %p55 = scmp.eq.s32.totalorder 0, 0
    // Predicated region
    $region34: #{tpu_custom_call.1} parent=1 // pred_check
      %p56 = pneg %p55
    $region35: #{tpu_custom_call.1} parent=1 // pred_check_branch
      %58 = sbr.rel (%p56) target = $region37
    $region36: #{tpu_custom_call.1} parent=1 // pred_region
      %vm59 = vcmask 261120
      %60 = vst.msk [vmem:[#allocation2] sm:$0xff] %vm59, 0.0
      %61 = vst.msk [vmem:[#allocation2 + $0x8] sm:$0xff] %vm59, 0.0
    $region37: #{tpu_custom_call.1} parent=1 // pred_fallthru
      _
    %v62 = vld [vmem:[%s4] sm:$0xff]
    %v63 = vld [vmem:[%s4 + $0x8] sm:$0xff]
    %v64 = vld [vmem:[%s4 + $0x10] sm:$0xff]
    %v65 = vld [vmem:[%s4 + $0x18] sm:$0xff]
    %vm66 = vcmask 261120
    %v68 = vsel %vm66, %v53, 0
    %v71 = vsel %vm66, %v54, 0
    %73 = vmatpush.msra.mxu0 0.0
    %74 = vmatpush.msra.mxu0 0.0
    %75 = vmatpush.msra.mxu0 0.0
    %76 = vmatpush.msra.mxu0 0.0
    %77 = vmatpush.msra.mxu0 0.0
    %78 = vmatpush.msra.mxu0 0.0
    %79 = vmatpush.msra.mxu0 0.0
    %80 = vmatpush.msra.mxu0 0.0
    %81 = vmatpush.msra.mxu0 0.0
    %82 = vmatpush.msra.mxu0 0.0
    %83 = vmatpush.msra.mxu0 0.0
    %84 = vmatpush.msra.mxu0 0.0
    %85 = vmatpush.msra.mxu0 %v65
    %86 = vmatpush.msra.mxu0 %v64
    %87 = vmatpush.msra.mxu0 %v63
    %88 = vmatpush.msra.mxu0 %v62
    %89 = vmatmul.f32.gmra.mxu0 %v68
    %v90 = vpop.f32.mrf.mxu0
    %v91 = vadd.f32 0.0, %v90
    %92 = vmatmul.f32.gmra.mxu0 %v71
    %v93 = vpop.f32.mrf.mxu0
    %v94 = vadd.f32 0.0, %v93
    %95 = vdwg.mxu0
    %v96 = vmax.f32 %v91, 0.0
    %v97 = vmax.f32 %v94, 0.0
    %v98 = vmul.f32 %v96, %v96
    %v99 = vmul.f32 %v97, %v97
    %v100 = vld [vmem:[#allocation2] sm:$0xff]
    %v101 = vld [vmem:[#allocation2 + $0x8] sm:$0xff]
    %v102 = vld [vmem:[%s5] sm:$0xff]
    %v103 = vld [vmem:[%s5 + $0x8] sm:$0xff]
    %v104 = vld [vmem:[%s5 + $0x10] sm:$0xff]
    %v105 = vld [vmem:[%s5 + $0x18] sm:$0xff]
    %v106 = vld [vmem:[%s5 + $0x20] sm:$0xff]
    %v107 = vld [vmem:[%s5 + $0x28] sm:$0xff]
    %v108 = vld [vmem:[%s5 + $0x30] sm:$0xff]
    %v109 = vld [vmem:[%s5 + $0x38] sm:$0xff]
    %vm110 = vcmask 523264
    %v112 = vsel %vm110, %v98, 0
    %v115 = vsel %vm110, %v99, 0
    %117 = vmatpush.msra.mxu0 0.0
    %118 = vmatpush.msra.mxu0 0.0
    %119 = vmatpush.msra.mxu0 0.0
    %120 = vmatpush.msra.mxu0 0.0
    %121 = vmatpush.msra.mxu0 0.0
    %122 = vmatpush.msra.mxu0 0.0
    %123 = vmatpush.msra.mxu0 0.0
    %124 = vmatpush.msra.mxu0 0.0
    %125 = vmatpush.msra.mxu0 %v109
    %126 = vmatpush.msra.mxu0 %v108
    %127 = vmatpush.msra.mxu0 %v107
    %128 = vmatpush.msra.mxu0 %v106
    %129 = vmatpush.msra.mxu0 %v105
    %130 = vmatpush.msra.mxu0 %v104
    %131 = vmatpush.msra.mxu0 %v103
    %132 = vmatpush.msra.mxu0 %v102
    %133 = vmatmul.f32.gmra.mxu0 %v112
    %v134 = vpop.f32.mrf.mxu0
    %v135 = vadd.f32 0.0, %v134
    %136 = vmatmul.f32.gmra.mxu0 %v115
    %v137 = vpop.f32.mrf.mxu0
    %v138 = vadd.f32 0.0, %v137
    %139 = vdwg.mxu0
    %v140 = vadd.f32 %v100, %v135
    %v141 = vadd.f32 %v101, %v138
    %142 = vst.msk [vmem:[#allocation2] sm:$0xff] %vm66, %v140
    %143 = vst.msk [vmem:[#allocation2 + $0x8] sm:$0xff] %vm66, %v141
    // Predicated region
    $region38: #{tpu_custom_call.1} parent=1 // pred_check
      %p144 = pneg %p55
    $region39: #{tpu_custom_call.1} parent=1 // pred_check_branch
      %146 = sbr.rel (%p144) target = $region41
    $region40: #{tpu_custom_call.1} parent=1 // pred_region
      %v147 = vld [vmem:[#allocation3] sm:$0x1]
      %v149 = vperm.slane %v147, 0
      %v151 = vmul.f32 %v45, %v149
      %v152 = vmul.f32 %v46, %v149
      %v153 = vadd.f32 %v41, %v151
      %v154 = vadd.f32 %v42, %v152
      %v155 = vld [vmem:[%s6] sm:$0xff]
      %v156 = vld [vmem:[%s6 + $0x8] sm:$0xff]
      %v157 = vld [vmem:[%s6 + $0x10] sm:$0xff]
      %v158 = vld [vmem:[%s6 + $0x18] sm:$0xff]
      %v160 = vsel %vm66, %v153, 0
      %v163 = vsel %vm66, %v154, 0
      %165 = vmatpush.msra.mxu0 0.0
      %166 = vmatpush.msra.mxu0 0.0
      %167 = vmatpush.msra.mxu0 0.0
      %168 = vmatpush.msra.mxu0 0.0
      %169 = vmatpush.msra.mxu0 0.0
      %170 = vmatpush.msra.mxu0 0.0
      %171 = vmatpush.msra.mxu0 0.0
      %172 = vmatpush.msra.mxu0 0.0
      %173 = vmatpush.msra.mxu0 0.0
      %174 = vmatpush.msra.mxu0 0.0
      %175 = vmatpush.msra.mxu0 0.0
      %176 = vmatpush.msra.mxu0 0.0
      %177 = vmatpush.msra.mxu0 %v158
      %178 = vmatpush.msra.mxu0 %v157
      %179 = vmatpush.msra.mxu0 %v156
      %180 = vmatpush.msra.mxu0 %v155
      %181 = vmatmul.f32.gmra.mxu0 %v160
      %v182 = vpop.f32.mrf.mxu0
      %v183 = vadd.f32 0.0, %v182
      %184 = vmatmul.f32.gmra.mxu0 %v163
      %v185 = vpop.f32.mrf.mxu0
      %v186 = vadd.f32 0.0, %v185
      %187 = vdwg.mxu0
      %v188 = vxor.u32 %v183, 2147483648
      %v189 = vxor.u32 %v186, 2147483648
      %v190 = vmul.f32 %v188, 1.442695
      %v191 = vpow.pop %v190
      %v192 = vmul.f32 %v189, 1.442695
      %v193 = vpow.pop %v192
      %v194 = vadd.f32 %v191, 1.0
      %v195 = vadd.f32 %v193, 1.0
      %v196 = vrcp.pop %v194
      %v197 = vmul.f32 %v194, %v196
      %v198 = vsub.f32 1.0, %v197
      %v199 = vmul.f32 %v196, %v198
      %v200 = vadd.f32 %v196, %v199
      %vm201 = vweird.f32 %v194
      %vm202 = vweird.f32 %v196
      %vm203 = vmor %vm201, %vm202
      %v204 = vsel %vm203, %v196, %v200
      %v205 = vand.u32 2147483647, %v194
      %vm206 = vcmp.eq.f32.partialorder %v205, 8.507059e+37
      %v207 = vand.u32 %v194, 2147483648
      %v208 = vor.u32 1.1754944e-38, %v207
      %v209 = vsel %vm206, %v208, %v204
      %v210 = vmul.f32 1.0, %v209
      %v211 = vrcp.pop %v195
      %v212 = vmul.f32 %v195, %v211
      %v213 = vsub.f32 1.0, %v212
      %v214 = vmul.f32 %v211, %v213
      %v215 = vadd.f32 %v211, %v214
      %vm216 = vweird.f32 %v195
      %vm217 = vweird.f32 %v211
      %vm218 = vmor %vm216, %vm217
      %v219 = vsel %vm218, %v211, %v215
      %v220 = vand.u32 2147483647, %v195
      %vm221 = vcmp.eq.f32.partialorder %v220, 8.507059e+37
      %v222 = vand.u32 %v195, 2147483648
      %v223 = vor.u32 1.1754944e-38, %v222
      %v224 = vsel %vm221, %v223, %v219
      %v225 = vmul.f32 1.0, %v224
      %v226 = vld [vmem:[#allocation2] sm:$0xff]
      %v227 = vld [vmem:[#allocation2 + $0x8] sm:$0xff]
      %v228 = vmul.f32 %v210, %v226
      %v229 = vmul.f32 %v225, %v227
      %230 = vst.msk [vmem:[#allocation6] sm:$0xff] %vm66, %v228
      %231 = vst.msk [vmem:[#allocation6 + $0x8] sm:$0xff] %vm66, %v229
    $region41: #{tpu_custom_call.1} parent=1 // pred_fallthru
      _
    // Predicated region
    $region42: #{tpu_custom_call.1} parent=1 // pred_check
      _
    $region43: #{tpu_custom_call.1} parent=1 // pred_check_branch
      %233 = sbr.rel (0) target = $region45
    $region44: #{tpu_custom_call.1} parent=1 // pred_region
      %235 = vsyncadd [#allocation5], 0
      %s236 = sshll.u32 [#allocation6], 4
      %s237 = int_to_ptr.vmem [resolvable:$true] %s236
      %s238 = sshll.u32 %s7, 4
      %s239 = int_to_ptr.hbm [resolvable:$true] %s238
      %244 = dma.vmem_to_hbm [thread:$0]  %s237, 256, %s239, [#allocation5], 128, 128, 8
    $region45: #{tpu_custom_call.1} parent=1 // pred_fallthru
      _
    // Predicated region
    $region46: #{tpu_custom_call.1} parent=1 // pred_check
      _
    $region47: #{tpu_custom_call.1} parent=1 // pred_check_branch
      %246 = sbr.rel (0) target = $region49
    $region48: #{tpu_custom_call.1} parent=1 // pred_region
      %248 = dma.done [#allocation5], 256
    $region49: #{tpu_custom_call.1} parent=1 // pred_fallthru
      _
    %249 = vsyncpa [#allocation4], 1
    %250 = vsyncpa [#allocation5], 1

</llo_original>
